<compile_context>
chip_gen: v7x
topology: tpu7x:2x2x1
jax: 0.10.0
libtpu: 0.0.40
codegen_flags: <defaults>
</compile_context>

<pallas_src>
import functools

import jax
import jax.numpy as jnp
from jax.experimental import pallas as pl
from jax.experimental.pallas import tpu as pltpu

_LANE = 128


def _pe_dropout_kernel(seed_ref, x_ref, pe_ref, o_ref, *,
                       dropout_p, training, block_b, block_c, total_cols):
    # x_ref : (block_b, block_c)   rows = batch, cols = flattened (seq, d_model)
    # pe_ref: (1, block_c)         broadcast over batch rows
    y = x_ref[...] + pe_ref[...]

    if training and dropout_p > 0.0:
        # Stateless counter-based hash -> per-element Bernoulli(1-p) keep mask.
        i = pl.program_id(0)
        j = pl.program_id(1)
        rows = jax.lax.broadcasted_iota(jnp.uint32, (block_b, block_c), 0)
        cols = jax.lax.broadcasted_iota(jnp.uint32, (block_b, block_c), 1)
        row_off = (i * block_b).astype(jnp.uint32)
        col_off = (j * block_c).astype(jnp.uint32)
        gidx = (rows + row_off) * jnp.uint32(total_cols) + (cols + col_off)
        h = gidx ^ (seed_ref[0].astype(jnp.uint32) * jnp.uint32(0x9E3779B9))
        h = (h ^ (h >> jnp.uint32(16))) * jnp.uint32(0x85EBCA6B)
        h = (h ^ (h >> jnp.uint32(13))) * jnp.uint32(0xC2B2AE35)
        h = h ^ (h >> jnp.uint32(16))
        # Integer-domain keep decision on the top 24 bits (signed-safe compare).
        thresh = jnp.int32(int(round(dropout_p * (1 << 24))))
        keep = (h >> jnp.uint32(8)).astype(jnp.int32) >= thresh
        scale = jnp.asarray(1.0 / (1.0 - dropout_p), dtype=y.dtype)
        y = jnp.where(keep, y * scale, jnp.zeros_like(y))

    o_ref[...] = y.astype(o_ref.dtype)


def learned_positional_embedding(x, pe, *, dropout_p=0.0, training=False, seed=0):
    """x: (B, S, D); pe: (1, max_len, D).  Returns dropout(x + pe[:, :S])."""
    B, S, D = x.shape
    assert pe.shape[0] == 1 and pe.shape[2] == D and pe.shape[1] >= S
    SD = S * D

    # Glue: flatten to a lane-dense 2-D view; pad cols to a multiple of 128.
    C = pl.cdiv(SD, _LANE) * _LANE
    x2 = x.reshape(B, SD)
    pe2 = pe[:, :S, :].reshape(1, SD)
    if C != SD:
        x2 = jnp.pad(x2, ((0, 0), (0, C - SD)))
        pe2 = jnp.pad(pe2, ((0, 0), (0, C - SD)))

    # Tile selection: lane-dense cols (multiple of 128), large blocks (~2 MiB)
    # to amortize per-grid-step overhead while staying within v7x's smaller
    # scoped-VMEM budget with double-buffered x / pe / out.
    itemsize = jnp.dtype(x.dtype).itemsize
    target_elems = (2 * 1024 * 1024) // itemsize
    block_c = min(C, 4096)                       # multiple of 128 (or full C)
    max_rows = max(1, target_elems // block_c)
    if B <= max_rows:
        block_b = B                              # full batch dim (always legal)
    else:
        block_b = max(8, (max_rows // 8) * 8)    # multiple of 8 sublanes
    grid = (pl.cdiv(B, block_b), pl.cdiv(C, block_c))

    kernel = functools.partial(
        _pe_dropout_kernel,
        dropout_p=float(dropout_p), training=bool(training),
        block_b=block_b, block_c=block_c, total_cols=int(C))
    seed_arr = jnp.asarray([seed], dtype=jnp.int32)

    out2 = pl.pallas_call(
        kernel,
        out_shape=jax.ShapeDtypeStruct((B, C), x.dtype),
        grid_spec=pltpu.PrefetchScalarGridSpec(
            num_scalar_prefetch=1,                                    # seed -> SMEM
            grid=grid,
            in_specs=[
                pl.BlockSpec((block_b, block_c), lambda i, j, seed: (i, j)),  # x
                pl.BlockSpec((1, block_c), lambda i, j, seed: (0, j)),        # pe
            ],
            out_specs=pl.BlockSpec((block_b, block_c), lambda i, j, seed: (i, j)),
        ),
        compiler_params=pltpu.CompilerParams(
            # Stateless (hash) RNG -> every grid point independent -> parallel.
            dimension_semantics=("parallel", "parallel"),
        ),
    )(seed_arr, x2, pe2)

    if C != SD:
        out2 = out2[:, :SD]
    return out2.reshape(B, S, D)


if __name__ == "__main__":
    # Module config consistent with the forward: d_model=32, max_len=512.
    B, S, D = 2, 8, 32
    MAX_LEN = 512
    DROPOUT_P = 0.1

    key = jax.random.PRNGKey(0)
    kx, kpe = jax.random.split(key)
    x = jax.random.normal(kx, (B, S, D), dtype=jnp.float32)
    pe = jax.random.normal(kpe, (1, MAX_LEN, D), dtype=jnp.float32)  # "learned" param

    ref = x + pe[:, :S, :]

    # Eval mode (dropout is identity): exact semantics check.
    out_eval = jax.block_until_ready(
        learned_positional_embedding(x, pe, dropout_p=DROPOUT_P, training=False))
    assert out_eval.shape == (B, S, D)
    assert jnp.allclose(out_eval, ref, atol=1e-6), "eval-mode mismatch"

    # Training mode: inverted dropout (survivors = ref/(1-p), dropped = 0).
    out_train = jax.block_until_ready(
        learned_positional_embedding(x, pe, dropout_p=DROPOUT_P, training=True,
                                     seed=1234))
    scaled = ref / (1.0 - DROPOUT_P)
    ok = jnp.logical_or(jnp.isclose(out_train, scaled, atol=1e-5),
                        jnp.isclose(out_train, 0.0, atol=1e-7))
    assert bool(jnp.all(ok)), "train-mode dropout values inconsistent"
    n_zero = int(jnp.sum(out_train == 0))
    assert 0 < n_zero < B * S * D, "dropout mask degenerate"

    print("KERNEL_OK")
</pallas_src>

<mosaic_0001>
module attributes {stable_mosaic.version = 11 : i64} {
  func.func @_pe_dropout_kernel(%arg0: i32, %arg1: i32, %arg2: memref<1xi32, #tpu.memory_space<smem>>, %arg3: memref<2x256xf32, #tpu.memory_space<vmem>>, %arg4: memref<1x256xf32, #tpu.memory_space<vmem>>, %arg5: memref<2x256xf32, #tpu.memory_space<vmem>>) attributes {dimension_semantics = [#tpu.dimension_semantics<parallel>, #tpu.dimension_semantics<parallel>], iteration_bounds = array<i64: 1, 1>, scalar_prefetch = 1 : i64, scratch_operands = 0 : i64, tpu.core_type = #tpu.core_type<tc>, window_params = [{transform_indices = @transform_0, window_bounds = array<i64: 2, 256>}, {transform_indices = @transform_1, window_bounds = array<i64: 1, 256>}, {transform_indices = @transform_2, window_bounds = array<i64: 2, 256>}]} {
    %c0 = arith.constant 0 : index
    %c0_0 = arith.constant 0 : index
    %0 = vector.load %arg3[%c0, %c0_0] : memref<2x256xf32, #tpu.memory_space<vmem>>, vector<2x256xf32>
    %c0_1 = arith.constant 0 : index
    %c0_2 = arith.constant 0 : index
    %1 = vector.load %arg4[%c0_1, %c0_2] : memref<1x256xf32, #tpu.memory_space<vmem>>, vector<1x256xf32>
    %2 = vector.broadcast %1 : vector<1x256xf32> to vector<2x256xf32>
    %3 = arith.addf %0, %2 : vector<2x256xf32>
    %c0_3 = arith.constant 0 : index
    %c0_4 = arith.constant 0 : index
    %4 = vector.load %arg5[%c0_3, %c0_4] : memref<2x256xf32, #tpu.memory_space<vmem>>, vector<2x256xf32>
    tpu.vector_store %arg5[%c0_3, %c0_4], %3 {strides = array<i32>} : memref<2x256xf32, #tpu.memory_space<vmem>>, vector<2x256xf32>,
    return
  }
  func.func @transform_0(%arg0: i32, %arg1: i32, %arg2: memref<1xi32, #tpu.memory_space<smem>>) -> (i32, i32) {
    %c0_i32 = arith.constant 0 : i32
    return %arg0, %arg1 : i32, i32
  }
  func.func @transform_1(%arg0: i32, %arg1: i32, %arg2: memref<1xi32, #tpu.memory_space<smem>>) -> (i32, i32) {
    %c0_i32 = arith.constant 0 : i32
    %c0_i32_0 = arith.constant 0 : i32
    return %c0_i32, %arg1 : i32, i32
  }
  func.func @transform_2(%arg0: i32, %arg1: i32, %arg2: memref<1xi32, #tpu.memory_space<smem>>) -> (i32, i32) {
    %c0_i32 = arith.constant 0 : i32
    return %arg0, %arg1 : i32, i32
  }
}

</mosaic_0001>

<llo_original>
// kernel: tpu_custom_call.1
$region0: #{tpu_custom_call.1}
  #allocation0 [shape = 'u32[]', space=smem, size = 0x4, offset = 0x4, fixed_abs, tag = 'smem constant byte address 0x4 - core index']
  #allocation1 [shape = 'u32[144,128]{1,0:T(1,128)}', space=vmem, size = 0x12000, scoped, tag = 'internal scratch']
  #allocation2 [shape = 's32[1]{0}', space=sflag, size = 0x4, scoped, tag = 'scoped memory for tpu_custom_call.1']
  #allocation3 [shape = 's32[1]{0:T(128)S(6)}', space=smem, size = 0x200, scoped, tag = 'prefetched SMEM operand 0']
  %s0 = inlined_call_operand.<no memory space> [shape: s32[1], index: 0, kind: input, shape index: {}]
  %s1 = inlined_call_operand.hbm [shape: f32[2,256], index: 1, kind: input, shape index: {}]
  %s2 = inlined_call_operand.vmem [shape: f32[1,256], index: 2, kind: input, shape index: {}]
  %s3 = inlined_call_operand.hbm [shape: f32[2,256], index: 3, kind: output, shape index: {}]
  %s4 = sld [smem:[#allocation0]]
  $region22: #{tpu_custom_call.1} parent=0
    _
  %s6 = ssub.s32 1, %s4
  %s7 = scalar_select 0, %s6, %s4
  %8 = sst [smem:[#allocation3]] %s0
  $region1: #{tpu_custom_call.1} parent=0
    #allocation4 [shape = 'u8[2048]{0}', space=vmem, size = 0x800, scoped, tag = 'input window, operand 1, single buffered']
    #allocation5 [shape = 's32[1]{0}', space=sflag, size = 0x4, scoped, tag = 'scoped memory for tpu_custom_call.1']
    #allocation6 [shape = 's32[1]{0}', space=sflag, size = 0x4, scoped, tag = 'scoped memory for tpu_custom_call.1']
    #allocation7 [shape = 'u8[2048]{0}', space=vmem, size = 0x800, scoped, tag = 'output window, operand 0, single buffered']
    %9 = vsyncpa [#allocation5], 0
    %10 = vsyncpa [#allocation6], 0
    // Predicated region
    $region2: #{tpu_custom_call.1} parent=1 // pred_check
      _
    $region3: #{tpu_custom_call.1} parent=1 // pred_check_branch
      %12 = sbr.rel (0) target = $region5
    $region4: #{tpu_custom_call.1} parent=1 // pred_region
      %s14 = ssub.s32 64, 64
      %15 = vsyncadd [#allocation5], %s14
      %s17 = sshll.u32 [#allocation4], 4
      %s18 = int_to_ptr.vmem [resolvable:$true] %s17
      %20 = dma.hbm_to_vmem [thread:$0]  %s1, 64, %s18, [#allocation5]
    $region5: #{tpu_custom_call.1} parent=1 // pred_fallthru
      _
    // Predicated region
    $region6: #{tpu_custom_call.1} parent=1 // pred_check
      _
    $region7: #{tpu_custom_call.1} parent=1 // pred_check_branch
      %22 = sbr.rel (0) target = $region9
    $region8: #{tpu_custom_call.1} parent=1 // pred_region
      _
    $region9: #{tpu_custom_call.1} parent=1 // pred_fallthru
      _
    // Predicated region
    $region10: #{tpu_custom_call.1} parent=1 // pred_check
      _
    $region11: #{tpu_custom_call.1} parent=1 // pred_check_branch
      %24 = sbr.rel (0) target = $region13
    $region12: #{tpu_custom_call.1} parent=1 // pred_region
      %25 = dma.done [#allocation5], 64
    $region13: #{tpu_custom_call.1} parent=1 // pred_fallthru
      _
    %v26 = vld [vmem:[#allocation4] sm:$0xf]
    %v27 = vld [vmem:[%s2] sm:$0x3]
    %v29 = vlaneseq
    %v30 = vshrl.u32 %v29, 7
    %v31 = vsub.s32 0, %v30
    %v32 = vrot.slane %v27, %v31
    %v33 = vlaneseq
    %v34 = vshrl.u32 %v33, 7
    %v35 = vsub.s32 1, %v34
    %v36 = vrot.slane %v27, %v35
    %v37 = vcombine.low %v32, %v36
    %v39 = vunpack.c.l.s4 1983009808
    %v40 = vunpack.c.0.s8 %v39
    %v41 = vlaneseq
    %v42 = vshrl.u32 %v41, 7
    %v43 = vsub.s32 %v40, %v42
    %v44 = vrot.slane %v37, %v43
    %v46 = vadd.f32 %v26, %v44
    %47 = vst [vmem:[#allocation7] sm:$0xf] %v46
    // Predicated region
    $region14: #{tpu_custom_call.1} parent=1 // pred_check
      _
    $region15: #{tpu_custom_call.1} parent=1 // pred_check_branch
      %49 = sbr.rel (0) target = $region17
    $region16: #{tpu_custom_call.1} parent=1 // pred_region
      %s51 = ssub.s32 64, 64
      %52 = vsyncadd [#allocation6], %s51
      %s54 = sshll.u32 [#allocation7], 4
      %s55 = int_to_ptr.vmem [resolvable:$true] %s54
      %57 = dma.vmem_to_hbm [thread:$0]  %s55, 64, %s3, [#allocation6]
    $region17: #{tpu_custom_call.1} parent=1 // pred_fallthru
      _
    // Predicated region
    $region18: #{tpu_custom_call.1} parent=1 // pred_check
      _
    $region19: #{tpu_custom_call.1} parent=1 // pred_check_branch
      %59 = sbr.rel (0) target = $region21
    $region20: #{tpu_custom_call.1} parent=1 // pred_region
      %60 = dma.done [#allocation6], 64
    $region21: #{tpu_custom_call.1} parent=1 // pred_fallthru
      _
    %61 = vsyncpa [#allocation5], 1
    %62 = vsyncpa [#allocation6], 1

</llo_original>
